<compile_context>
chip_gen: v7x
topology: tpu7x:2x2x1
jax: 0.10.0
libtpu: 0.0.40
codegen_flags: <defaults>
</compile_context>

<pallas_src>
import functools

import jax
import jax.numpy as jnp
from jax import lax
from jax.experimental import pallas as pl
from jax.experimental.pallas import tpu as pltpu


_NEG_BIG = -1e30                      # finite diagonal mask; exp() -> 0 cleanly
_VMEM_LIMIT = 32 * 1024 * 1024        # explicit scoped-VMEM limit (safe on v5e/v6e/v7x)


def _pick_tile(dim, cap):
    """Largest tile <= cap that divides `dim`, preferring multiples of 128
    (MXU-aligned) then multiples of 8 (sublane tiling); full dim if it fits."""
    cap = int(cap)
    if dim <= cap:
        return dim
    for step in (128, 8):
        for t in range(cap - cap % step, 0, -step):
            if dim % t == 0:
                return t
    # TODO(synk): pad ragged batch sizes instead of falling back to a full tile.
    return dim


# ---------------------------------------------------------------------------
# Pass 1: normalize + sqrt(1/T)-scale both views -> (2, B, D) bf16, and the
#         positive term pos = <r_i, r_j>/T -> (B, 1) f32 (from f32 rows).
# ---------------------------------------------------------------------------
def _normalize_kernel(zi_ref, zj_ref, reps_ref, pos_ref, *, scale):
    xi = zi_ref[...].astype(jnp.float32)
    xj = zj_ref[...].astype(jnp.float32)
    # 1/max(||x||, 1e-8) == rsqrt(max(||x||^2, 1e-16)); fold sqrt(1/T) in too,
    # so pass 2 needs no 1/T multiply at all.
    si = xi * (lax.rsqrt(jnp.maximum(jnp.sum(xi * xi, axis=-1, keepdims=True),
                                     jnp.float32(1e-16))) * jnp.float32(scale))
    sj = xj * (lax.rsqrt(jnp.maximum(jnp.sum(xj * xj, axis=-1, keepdims=True),
                                     jnp.float32(1e-16))) * jnp.float32(scale))
    # scale^2 == 1/T, so <si, sj> == cos(z_i, z_j) / T  (unrounded f32).
    pos_ref[...] = jnp.sum(si * sj, axis=-1, keepdims=True)
    reps_ref[0] = si.astype(jnp.bfloat16)
    reps_ref[1] = sj.astype(jnp.bfloat16)


# ---------------------------------------------------------------------------
# Pass 2: tiled similarity + fixed-max exp-sum accumulation.
# ---------------------------------------------------------------------------
def _ntxent_tile_kernel(row_ref, col_ref, s_ref, *,
                        batch_size, tm, tk, nb, nbc, inv_temp):
    ri = pl.program_id(0)   # row-tile index over the (2, B) rows   ("parallel")
    ci = pl.program_id(1)   # column-tile index (reduction axis, "arbitrary")

    @pl.when(ci == 0)
    def _init():
        s_ref[...] = jnp.zeros_like(s_ref)

    # (tm, tk) tile of the scaled similarity matrix on the MXU: bf16 operands,
    # f32 accumulation.  Rows were pre-scaled by sqrt(1/T), so sim == cos/T.
    sim = lax.dot_general(row_ref[0], col_ref[0],
                          dimension_numbers=(((1,), (1,)), ((), ())),
                          preferred_element_type=jnp.float32)
    # TODO(synk): if a bundle dump shows a per-step vxpose of the column tile,
    # emit a (2, D, B) K-major bf16 copy in pass 1 and use a (TM,D)x(D,TK) dot.

    row_base = (ri // nb) * batch_size + (ri % nb) * tm
    col_base = (ci // nbc) * batch_size + (ci % nbc) * tk
    diag_here = jnp.logical_and(row_base < col_base + tk,
                                col_base < row_base + tm)

    fmax = jnp.float32(inv_temp)   # fixed logsumexp max: cos <= 1  =>  sim <= 1/T

    # Fast path: no diagonal in this tile -> no iota/compare/where work.
    @pl.when(jnp.logical_not(diag_here))
    def _plain():
        s_ref[0] += jnp.sum(jnp.exp(sim - fmax), axis=-1, keepdims=True)

    # Slow path: mask the global diagonal where it crosses this tile.
    @pl.when(diag_here)
    def _masked():
        rid = row_base + lax.broadcasted_iota(jnp.int32, (tm, tk), 0)
        cid = col_base + lax.broadcasted_iota(jnp.int32, (tm, tk), 1)
        masked = jnp.where(rid == cid, jnp.float32(_NEG_BIG), sim)
        s_ref[0] += jnp.sum(jnp.exp(masked - fmax), axis=-1, keepdims=True)


# ---------------------------------------------------------------------------
# Wrapper
# ---------------------------------------------------------------------------
def ntxent_loss(z_i, z_j, temperature=0.1, *, tile_m=None, tile_k=None):
    """Pallas TPU implementation of NTXentLoss.forward(z_i, z_j)."""
    assert z_i.shape == z_j.shape and z_i.ndim == 2
    b, d = z_i.shape
    assert b >= 2, "NT-Xent needs at least 2 samples per view"
    inv_temp = 1.0 / float(temperature)

    # --- pass 1: normalized, sqrt(1/T)-scaled bf16 reps + f32 positives ------
    tmn = _pick_tile(b, max(8, (8 * 2**20) // (24 * d)))
    reps, pos = pl.pallas_call(
        functools.partial(_normalize_kernel, scale=inv_temp ** 0.5),
        out_shape=(jax.ShapeDtypeStruct((2, b, d), jnp.bfloat16),
                   jax.ShapeDtypeStruct((b, 1), jnp.float32)),
        grid_spec=pltpu.PrefetchScalarGridSpec(
            num_scalar_prefetch=0,
            grid=(b // tmn,),
            in_specs=[pl.BlockSpec((tmn, d), lambda i: (i, 0)),
                      pl.BlockSpec((tmn, d), lambda i: (i, 0))],
            out_specs=[pl.BlockSpec((2, tmn, d), lambda i: (0, i, 0)),
                       pl.BlockSpec((tmn, 1), lambda i: (i, 0))]),
        compiler_params=pltpu.CompilerParams(
            dimension_semantics=("parallel",),
            vmem_limit_bytes=_VMEM_LIMIT),
    )(z_i, z_j)

    # --- pass 2: tiled fixed-max exp-sum over the (2B, 2B) similarities ------
    if tile_m is None:
        # Big row tiles cut per-step pipeline overhead and column re-streaming;
        # budget ~5 MiB of double-buffered bf16 row blocks.
        tile_m = _pick_tile(b, min(1024, max(128, (5 * 2**20) // (4 * d))))
    if tile_k is None:
        # Full half when D is small; otherwise up to 2048, ~8 MiB budget.
        cap = b if d <= 256 else 2048
        tile_k = _pick_tile(b, min(cap, max(128, (8 * 2**20) // (4 * d))))
    tm, tk = int(tile_m), int(tile_k)
    assert b % tm == 0 and b % tk == 0, (b, tm, tk)
    nb, nbc = b // tm, b // tk

    kernel = functools.partial(
        _ntxent_tile_kernel, batch_size=b, tm=tm, tk=tk, nb=nb, nbc=nbc,
        inv_temp=inv_temp)

    row_sums = pl.pallas_call(
        kernel,
        out_shape=jax.ShapeDtypeStruct((2, b, 1), jnp.float32),
        grid_spec=pltpu.PrefetchScalarGridSpec(
            num_scalar_prefetch=0,
            grid=(2 * nb, 2 * nbc),
            in_specs=[
                # resident row tile (index ignores ci -> fetched once per row tile)
                pl.BlockSpec((1, tm, d), lambda ri, ci: (ri // nb, ri % nb, 0)),
                # streaming column tile
                pl.BlockSpec((1, tk, d), lambda ri, ci: (ci // nbc, ci % nbc, 0)),
            ],
            out_specs=pl.BlockSpec((1, tm, 1),
                                   lambda ri, ci: (ri // nb, ri % nb, 0))),
        compiler_params=pltpu.CompilerParams(
            dimension_semantics=("parallel", "arbitrary"),
            vmem_limit_bytes=_VMEM_LIMIT),
    )(reps, reps)

    # Tiny O(N) finish in XLA: lse = 1/T + log(sum exp(sim - 1/T)).  The
    # positive term is identical for both halves, so its mean over 2B rows
    # equals its mean over B.
    lse = jnp.float32(inv_temp) + jnp.log(row_sums[:, :, 0])
    return jnp.mean(lse) - jnp.mean(pos)


# ---------------------------------------------------------------------------
# Pure-JAX f32 reference mirroring the PyTorch module (for validation).
# ---------------------------------------------------------------------------
def _ntxent_loss_ref(z_i, z_j, temperature=0.1):
    b = z_i.shape[0]
    reps = jnp.concatenate([z_i, z_j], axis=0).astype(jnp.float32)
    norm = jnp.maximum(jnp.linalg.norm(reps, axis=-1, keepdims=True), 1e-8)
    rn = reps / norm
    sim = (rn @ rn.T) / temperature
    n = 2 * b
    eye = jnp.eye(n, dtype=bool)
    pos_mask = jnp.roll(eye, b, axis=1)
    sim_no_diag = jnp.where(eye, -jnp.inf, sim)
    lse = jax.scipy.special.logsumexp(sim_no_diag, axis=-1)
    pos = jnp.sum(jnp.where(pos_mask, sim, 0.0), axis=-1)
    return jnp.mean(lse - pos)


if __name__ == "__main__":
    key = jax.random.PRNGKey(0)
    cases = [
        dict(batch=4, dim=32),                        # single full-dim blocks
        dict(batch=16, dim=128),                      # one tile per half, 2x2 grid
        dict(batch=32, dim=64, tile_m=8, tile_k=16),  # forced multi-tile grid:
                                                      # exercises cross-tile exp-sum
                                                      # accumulation, conditional
                                                      # diagonal masking, and the
                                                      # cross-half column stream
    ]
    for case in cases:
        b, d = case["batch"], case["dim"]
        k1, k2 = jax.random.split(jax.random.fold_in(key, b * 1000 + d))
        z_i = jax.random.normal(k1, (b, d), dtype=jnp.float32)
        z_j = jax.random.normal(k2, (b, d), dtype=jnp.float32)
        kw = {k: case[k] for k in ("tile_m", "tile_k") if k in case}

        loss = jax.block_until_ready(ntxent_loss(z_i, z_j, temperature=0.1, **kw))
        ref = jax.block_until_ready(_ntxent_loss_ref(z_i, z_j, temperature=0.1))

        # bf16 MXU operands (f32 accumulation) => ~1e-2 absolute error on an
        # O(1) loss; the f32 positive term from pass 1 tightens it slightly.
        assert jnp.allclose(loss, ref, atol=2e-2, rtol=2e-2), \
            (case, float(loss), float(ref))

    print("KERNEL_OK")
</pallas_src>

<mosaic_0001>
module attributes {stable_mosaic.version = 11 : i64} {
  func.func @_normalize_kernel(%arg0: i32, %arg1: memref<4x32xf32, #tpu.memory_space<vmem>>, %arg2: memref<4x32xf32, #tpu.memory_space<vmem>>, %arg3: memref<2x4x32xbf16, #tpu.memory_space<vmem>>, %arg4: memref<4x1xf32, #tpu.memory_space<vmem>>) attributes {dimension_semantics = [#tpu.dimension_semantics<parallel>], iteration_bounds = array<i64: 1>, scalar_prefetch = 0 : i64, scratch_operands = 0 : i64, tpu.core_type = #tpu.core_type<tc>, window_params = [{transform_indices = @transform_0, window_bounds = array<i64: 4, 32>}, {transform_indices = @transform_1, window_bounds = array<i64: 4, 32>}, {transform_indices = @transform_2, window_bounds = array<i64: 2, 4, 32>}, {transform_indices = @transform_3, window_bounds = array<i64: 4, 1>}]} {
    %c0 = arith.constant 0 : index
    %c0_0 = arith.constant 0 : index
    %0 = vector.load %arg1[%c0, %c0_0] : memref<4x32xf32, #tpu.memory_space<vmem>>, vector<4x32xf32>
    %c0_1 = arith.constant 0 : index
    %c0_2 = arith.constant 0 : index
    %1 = vector.load %arg2[%c0_1, %c0_2] : memref<4x32xf32, #tpu.memory_space<vmem>>, vector<4x32xf32>
    %2 = arith.mulf %0, %0 : vector<4x32xf32>
    %cst = arith.constant dense<0.000000e+00> : vector<4xf32>
    %3 = vector.multi_reduction <add>, %2, %cst [1] : vector<4x32xf32> to vector<4xf32>
    %4 = vector.shape_cast %3 : vector<4xf32> to vector<4x1xf32>
    %cst_3 = arith.constant 1.000000e-16 : f32
    %5 = vector.broadcast %cst_3 : f32 to vector<4x1xf32>
    %6 = arith.maximumf %4, %5 : vector<4x1xf32>
    %7 = math.rsqrt %6 : vector<4x1xf32>
    %cst_4 = arith.constant 3.1622777 : f32
    %8 = vector.broadcast %cst_4 : f32 to vector<4x1xf32>
    %9 = arith.mulf %7, %8 : vector<4x1xf32>
    %10 = vector.broadcast %9 : vector<4x1xf32> to vector<4x32xf32>
    %11 = arith.mulf %0, %10 : vector<4x32xf32>
    %12 = arith.mulf %1, %1 : vector<4x32xf32>
    %cst_5 = arith.constant dense<0.000000e+00> : vector<4xf32>
    %13 = vector.multi_reduction <add>, %12, %cst_5 [1] : vector<4x32xf32> to vector<4xf32>
    %14 = vector.shape_cast %13 : vector<4xf32> to vector<4x1xf32>
    %cst_6 = arith.constant 1.000000e-16 : f32
    %15 = vector.broadcast %cst_6 : f32 to vector<4x1xf32>
    %16 = arith.maximumf %14, %15 : vector<4x1xf32>
    %17 = math.rsqrt %16 : vector<4x1xf32>
    %cst_7 = arith.constant 3.1622777 : f32
    %18 = vector.broadcast %cst_7 : f32 to vector<4x1xf32>
    %19 = arith.mulf %17, %18 : vector<4x1xf32>
    %20 = vector.broadcast %19 : vector<4x1xf32> to vector<4x32xf32>
    %21 = arith.mulf %1, %20 : vector<4x32xf32>
    %22 = arith.mulf %11, %21 : vector<4x32xf32>
    %cst_8 = arith.constant dense<0.000000e+00> : vector<4xf32>
    %23 = vector.multi_reduction <add>, %22, %cst_8 [1] : vector<4x32xf32> to vector<4xf32>
    %24 = vector.shape_cast %23 : vector<4xf32> to vector<4x1xf32>
    %c0_9 = arith.constant 0 : index
    %c0_10 = arith.constant 0 : index
    %25 = vector.load %arg4[%c0_9, %c0_10] : memref<4x1xf32, #tpu.memory_space<vmem>>, vector<4x1xf32>
    tpu.vector_store %arg4[%c0_9, %c0_10], %24 {strides = array<i32>} : memref<4x1xf32, #tpu.memory_space<vmem>>, vector<4x1xf32>,
    %26 = arith.truncf %11 : vector<4x32xf32> to vector<4x32xbf16>
    %c0_11 = arith.constant 0 : index
    %c0_12 = arith.constant 0 : index
    %c0_13 = arith.constant 0 : index
    %27 = vector.load %arg3[%c0_11, %c0_12, %c0_13] : memref<2x4x32xbf16, #tpu.memory_space<vmem>>, vector<1x4x32xbf16>
    %28 = vector.shape_cast %27 : vector<1x4x32xbf16> to vector<4x32xbf16>
    %29 = vector.shape_cast %26 : vector<4x32xbf16> to vector<1x4x32xbf16>
    tpu.vector_store %arg3[%c0_11, %c0_12, %c0_13], %29 {strides = array<i32>} : memref<2x4x32xbf16, #tpu.memory_space<vmem>>, vector<1x4x32xbf16>,
    %30 = arith.truncf %21 : vector<4x32xf32> to vector<4x32xbf16>
    %c1 = arith.constant 1 : index
    %c0_14 = arith.constant 0 : index
    %c0_15 = arith.constant 0 : index
    %31 = vector.load %arg3[%c1, %c0_14, %c0_15] : memref<2x4x32xbf16, #tpu.memory_space<vmem>>, vector<1x4x32xbf16>
    %32 = vector.shape_cast %31 : vector<1x4x32xbf16> to vector<4x32xbf16>
    %33 = vector.shape_cast %30 : vector<4x32xbf16> to vector<1x4x32xbf16>
    tpu.vector_store %arg3[%c1, %c0_14, %c0_15], %33 {strides = array<i32>} : memref<2x4x32xbf16, #tpu.memory_space<vmem>>, vector<1x4x32xbf16>,
    return
  }
  func.func @transform_0(%arg0: i32) -> (i32, i32) {
    %c0_i32 = arith.constant 0 : i32
    %c0_i32_0 = arith.constant 0 : i32
    return %arg0, %c0_i32 : i32, i32
  }
  func.func @transform_1(%arg0: i32) -> (i32, i32) {
    %c0_i32 = arith.constant 0 : i32
    %c0_i32_0 = arith.constant 0 : i32
    return %arg0, %c0_i32 : i32, i32
  }
  func.func @transform_2(%arg0: i32) -> (i32, i32, i32) {
    %c0_i32 = arith.constant 0 : i32
    %c0_i32_0 = arith.constant 0 : i32
    %c0_i32_1 = arith.constant 0 : i32
    return %c0_i32, %arg0, %c0_i32_0 : i32, i32, i32
  }
  func.func @transform_3(%arg0: i32) -> (i32, i32) {
    %c0_i32 = arith.constant 0 : i32
    %c0_i32_0 = arith.constant 0 : i32
    return %arg0, %c0_i32 : i32, i32
  }
}

</mosaic_0001>

<llo_original>
// kernel: tpu_custom_call.1
$region0: #{tpu_custom_call.1}
  #allocation0 [shape = 'u32[]', space=smem, size = 0x4, offset = 0x4, fixed_abs, tag = 'smem constant byte address 0x4 - core index']
  #allocation1 [shape = 'u32[144,128]{1,0:T(1,128)}', space=vmem, size = 0x12000, scoped, tag = 'internal scratch']
  %s0 = inlined_call_operand.hbm [shape: f32[4,32], index: 0, kind: input, shape index: {}]
  %s1 = inlined_call_operand.hbm [shape: f32[4,32], index: 1, kind: input, shape index: {}]
  %s2 = inlined_call_operand.hbm [shape: bf16[2,4,32], index: 2, kind: output, shape index: {0}]
  %s3 = inlined_call_operand.vmem [shape: f32[4,1], index: 3, kind: output, shape index: {1}]
  %4 = xla_tuple %s2, %s3
  %s5 = sld [smem:[#allocation0]]
  $region34: #{tpu_custom_call.1} parent=0
    _
  %s7 = ssub.s32 1, %s5
  %s8 = scalar_select 0, %s7, %s5
  $region1: #{tpu_custom_call.1} parent=0
    #allocation2 [shape = 'u8[2048]{0}', space=vmem, size = 0x800, scoped, tag = 'input window, operand 0, single buffered']
    #allocation3 [shape = 's32[1]{0}', space=sflag, size = 0x4, scoped, tag = 'scoped memory for tpu_custom_call.1']
    #allocation4 [shape = 's32[1]{0}', space=sflag, size = 0x4, scoped, tag = 'scoped memory for tpu_custom_call.1']
    #allocation5 [shape = 'u8[2048]{0}', space=vmem, size = 0x800, scoped, tag = 'input window, operand 1, single buffered']
    #allocation6 [shape = 's32[1]{0}', space=sflag, size = 0x4, scoped, tag = 'scoped memory for tpu_custom_call.1']
    #allocation7 [shape = 'u8[2048]{0}', space=vmem, size = 0x800, scoped, tag = 'output window, operand 0, single buffered']
    %9 = vsyncpa [#allocation3], 0
    %10 = vsyncpa [#allocation6], 0
    %11 = vsyncpa [#allocation4], 0
    // Predicated region
    $region2: #{tpu_custom_call.1} parent=1 // pred_check
      _
    $region3: #{tpu_custom_call.1} parent=1 // pred_check_branch
      %13 = sbr.rel (0) target = $region5
    $region4: #{tpu_custom_call.1} parent=1 // pred_region
      %s15 = ssub.s32 64, 64
      %16 = vsyncadd [#allocation3], %s15
      %s18 = sshll.u32 [#allocation2], 4
      %s19 = int_to_ptr.vmem [resolvable:$true] %s18
      %21 = dma.hbm_to_vmem [thread:$0]  %s0, 64, %s19, [#allocation3]
    $region5: #{tpu_custom_call.1} parent=1 // pred_fallthru
      _
    // Predicated region
    $region6: #{tpu_custom_call.1} parent=1 // pred_check
      _
    $region7: #{tpu_custom_call.1} parent=1 // pred_check_branch
      %23 = sbr.rel (0) target = $region9
    $region8: #{tpu_custom_call.1} parent=1 // pred_region
      %s25 = ssub.s32 64, 64
      %26 = vsyncadd [#allocation6], %s25
      %s28 = sshll.u32 [#allocation5], 4
      %s29 = int_to_ptr.vmem [resolvable:$true] %s28
      %31 = dma.hbm_to_vmem [thread:$0]  %s1, 64, %s29, [#allocation6]
    $region9: #{tpu_custom_call.1} parent=1 // pred_fallthru
      _
    // Predicated region
    $region10: #{tpu_custom_call.1} parent=1 // pred_check
      _
    $region11: #{tpu_custom_call.1} parent=1 // pred_check_branch
      %33 = sbr.rel (0) target = $region13
    $region12: #{tpu_custom_call.1} parent=1 // pred_region
      %34 = dma.done [#allocation3], 64
    $region13: #{tpu_custom_call.1} parent=1 // pred_fallthru
      _
    // Predicated region
    $region14: #{tpu_custom_call.1} parent=1 // pred_check
      _
    $region15: #{tpu_custom_call.1} parent=1 // pred_check_branch
      %36 = sbr.rel (0) target = $region17
    $region16: #{tpu_custom_call.1} parent=1 // pred_region
      %37 = dma.done [#allocation6], 64
    $region17: #{tpu_custom_call.1} parent=1 // pred_fallthru
      _
    %v38 = vld [vmem:[#allocation2] sm:$0xf]
    %v39 = vld [vmem:[#allocation5] sm:$0xf]
    %v40 = vmul.f32 %v38, %v38
    %vm41 = vcmask 257024
    %v42 = vsel %vm41, %v40, 0.0
    %43 = vadd.xlane.f32.xlu0 %v42
    %v44 = vpop.xlane.xlu0 %43
    %v45 = vmax.f32 %v44, 1e-16
    %v46 = vrsqrt.pop %v45
    %v47 = vmul.f32 %v46, 3.1622777
    %v48 = vmul.f32 %v38, %v47
    %v49 = vmul.f32 %v39, %v39
    %v50 = vsel %vm41, %v49, 0.0
    %51 = vadd.xlane.f32.xlu0 %v50
    %v52 = vpop.xlane.xlu0 %51
    %v53 = vmax.f32 %v52, 1e-16
    %v54 = vrsqrt.pop %v53
    %v55 = vmul.f32 %v54, 3.1622777
    %v56 = vmul.f32 %v39, %v55
    %v57 = vmul.f32 %v48, %v56
    %v58 = vsel %vm41, %v57, 0.0
    %59 = vadd.xlane.f32.xlu0 %v58
    %v60 = vpop.xlane.xlu0 %59
    %vm61 = vcmask 3072
    %62 = vst.msk [vmem:[%s3] sm:$0xf] %vm61, %v60
    %v63 = vpack.c.bf16 %v48, %v48
    %vm64 = vcmask 254976
    %65 = vst.msk [vmem:[#allocation7] sm:$0x3] %vm64, %v63
    %v66 = vpack.c.bf16 %v56, %v56
    %s67 = scalar_lea.vmem [#allocation7], 2
    %68 = vst.msk [vmem:[%s67] sm:$0x3] %vm64, %v66
    // Predicated region
    $region18: #{tpu_custom_call.1} parent=1 // pred_check
      _
    $region19: #{tpu_custom_call.1} parent=1 // pred_check_branch
      %70 = sbr.rel (0) target = $region21
    $region20: #{tpu_custom_call.1} parent=1 // pred_region
      %s72 = ssub.s32 64, 64
      %73 = vsyncadd [#allocation4], %s72
      %s74 = sshll.u32 [#allocation7], 4
      %s75 = int_to_ptr.vmem [resolvable:$true] %s74
      %80 = dma.vmem_to_hbm [thread:$0]  %s75, 64, %s2, [#allocation4], 32, 32, 2
    $region21: #{tpu_custom_call.1} parent=1 // pred_fallthru
      _
    // Predicated region
    $region22: #{tpu_custom_call.1} parent=1 // pred_check
      _
    $region23: #{tpu_custom_call.1} parent=1 // pred_check_branch
      %82 = sbr.rel (0) target = $region25
    $region24: #{tpu_custom_call.1} parent=1 // pred_region
      _
    $region25: #{tpu_custom_call.1} parent=1 // pred_fallthru
      _
    // Predicated region
    $region26: #{tpu_custom_call.1} parent=1 // pred_check
      _
    $region27: #{tpu_custom_call.1} parent=1 // pred_check_branch
      %84 = sbr.rel (0) target = $region29
    $region28: #{tpu_custom_call.1} parent=1 // pred_region
      %85 = dma.done [#allocation4], 64
    $region29: #{tpu_custom_call.1} parent=1 // pred_fallthru
      _
    // Predicated region
    $region30: #{tpu_custom_call.1} parent=1 // pred_check
      _
    $region31: #{tpu_custom_call.1} parent=1 // pred_check_branch
      %87 = sbr.rel (0) target = $region33
    $region32: #{tpu_custom_call.1} parent=1 // pred_region
      _
    $region33: #{tpu_custom_call.1} parent=1 // pred_fallthru
      _
    %88 = vsyncpa [#allocation3], 1
    %89 = vsyncpa [#allocation6], 1
    %90 = vsyncpa [#allocation4], 1

</llo_original>
